<compile_context>
chip_gen: v5e
topology: v5e:2x2
jax: 0.10.0
libtpu: 0.0.40
codegen_flags: <defaults>
</compile_context>

<pallas_src>
import functools

import jax
import jax.numpy as jnp
from jax.experimental import pallas as pl
from jax.experimental.pallas import tpu as pltpu


def _sru_kernel(x_ref, w_ref, b_ref, wg_ref, o_ref, *, n_elem, eps, gate_threshold):
    # x_ref / o_ref : (1, 2, TGH, cpg, HW)
    # w_ref / b_ref / wg_ref : (2, TGH, cpg, 1)
    x = x_ref[...].astype(jnp.float32)

    # --- group statistics: single fused sum / sum-of-squares sweep ------------
    # (lane reduce first, then the cheap sublane reduce on the tiny result)
    s1 = jnp.sum(jnp.sum(x, axis=4, keepdims=True), axis=3, keepdims=True)       # (1,2,TGH,1,1)
    s2 = jnp.sum(jnp.sum(x * x, axis=4, keepdims=True), axis=3, keepdims=True)   # (1,2,TGH,1,1)
    mean = s1 * (1.0 / n_elem)
    # torch.std default is unbiased (ddof=1); clamp tiny negatives from cancellation.
    var = jnp.maximum((s2 - s1 * mean) / (n_elem - 1), 0.0)
    inv_std = 1.0 / (jnp.sqrt(var) + eps)      # per-group scalars only -> exact divide is free

    # --- fold normalization + per-channel affine into one scale/shift ---------
    w = w_ref[...][None].astype(jnp.float32)   # (1,2,TGH,cpg,1)
    b = b_ref[...][None].astype(jnp.float32)
    wg = wg_ref[...][None].astype(jnp.float32)
    scale = w * inv_std                        # (1,2,TGH,cpg,1)
    shift = b - mean * scale
    gn = x * scale + shift                     # one mul+add per element

    # --- gate: sigmoid(gn * w_gamma) thresholded (exp goes to the EUP slot) ---
    r = 1.0 / (1.0 + jnp.exp(-(gn * wg)))
    info = r >= gate_threshold

    # --- SRU reconstruct: swap the "non-informative" part between halves ------
    g0, g1 = gn[:, 0:1], gn[:, 1:2]            # (1,1,TGH,cpg,HW)
    m0, m1 = info[:, 0:1], info[:, 1:2]
    keep0 = jnp.where(m0, g0, 0.0)             # info_mask   * gn  (half 0)
    keep1 = jnp.where(m1, g1, 0.0)             # info_mask   * gn  (half 1)
    drop0 = g0 - keep0                         # noninfo_mask * gn (half 0)
    drop1 = g1 - keep1                         # noninfo_mask * gn (half 1)
    out = jnp.concatenate([keep0 + drop1, keep1 + drop0], axis=1)
    o_ref[...] = out.astype(o_ref.dtype)


def sru_forward(x, weight, bias, *, group_num=16, gate_threshold=0.5, eps=1e-10,
                vmem_block_budget_bytes=8 * 1024 * 1024):
    """x: (N, C, H, W); weight/bias: (C, 1, 1). Returns (N, C, H, W)."""
    N, C, H, W = x.shape
    G = group_num
    assert C >= G and C % G == 0, "channels must be divisible by group_num"
    assert C % 2 == 0 and G % 2 == 0, "SRU reconstruct splits channels/groups in half"
    cpg = C // G
    HW = H * W
    assert cpg * HW > 1, "degenerate group size (std with ddof=1 undefined)"
    Gh = G // 2  # number of group pairs

    # Free, contiguous reshapes (channel-major ordering is preserved).
    x5 = x.reshape(N, 2, Gh, cpg, HW)
    w5 = weight.reshape(2, Gh, cpg, 1).astype(jnp.float32)
    b5 = bias.reshape(2, Gh, cpg, 1).astype(jnp.float32)
    wg5 = (weight / jnp.sum(weight)).reshape(2, Gh, cpg, 1).astype(jnp.float32)

    # --- pick group-pairs per block against a VMEM budget ---------------------
    cpg_pad = ((cpg + 7) // 8) * 8             # sublane padding in VMEM
    hw_pad = ((HW + 127) // 128) * 128         # lane padding in VMEM
    bytes_per_pair = 2 * cpg_pad * hw_pad * 4  # both halves, f32
    divisors = [d for d in range(1, Gh + 1) if Gh % d == 0]
    fitting = [d for d in divisors
               if 4 * d * bytes_per_pair <= vmem_block_budget_bytes] or [1]
    tgh = max(fitting)                         # biggest block that fits (2 bufs x in/out)
    # ...but keep enough grid steps for DMA/compute overlap & megacore sharding.
    min_steps = 8
    while tgh > 1 and N * (Gh // tgh) < min_steps:
        smaller = [d for d in fitting if d < tgh]
        if not smaller:
            break
        tgh = max(smaller)

    grid = (N, Gh // tgh)
    kernel = functools.partial(_sru_kernel, n_elem=cpg * HW, eps=eps,
                               gate_threshold=gate_threshold)

    out5 = pl.pallas_call(
        kernel,
        out_shape=jax.ShapeDtypeStruct((N, 2, Gh, cpg, HW), x.dtype),
        grid_spec=pl.GridSpec(
            grid=grid,
            in_specs=[
                pl.BlockSpec((1, 2, tgh, cpg, HW), lambda n, j: (n, 0, j, 0, 0)),
                pl.BlockSpec((2, tgh, cpg, 1), lambda n, j: (0, j, 0, 0)),
                pl.BlockSpec((2, tgh, cpg, 1), lambda n, j: (0, j, 0, 0)),
                pl.BlockSpec((2, tgh, cpg, 1), lambda n, j: (0, j, 0, 0)),
            ],
            out_specs=pl.BlockSpec((1, 2, tgh, cpg, HW), lambda n, j: (n, 0, j, 0, 0)),
        ),
        compiler_params=pltpu.CompilerParams(
            dimension_semantics=("parallel", "parallel"),
            vmem_limit_bytes=32 * 1024 * 1024,
        ),
    )(x5, w5, b5, wg5)

    return out5.reshape(N, C, H, W)


if __name__ == "__main__":
    # Small shapes; group_num=8 keeps channels-per-group sublane-aligned (cpg=8)
    # and H*W=256 keeps the lane dim a multiple of 128 (unmasked stores).
    N, C, H, W = 2, 64, 16, 16
    GROUP_NUM = 8
    GATE_T = 0.5
    EPS = 1e-10

    key = jax.random.PRNGKey(0)
    kx, kw = jax.random.split(key)
    x = jax.random.normal(kx, (N, C, H, W), dtype=jnp.float32)
    # Mirror nn.Parameter(torch.randn(C,1,1)) / torch.zeros(C,1,1).
    weight = jax.random.normal(kw, (C, 1, 1), dtype=jnp.float32)
    bias = jnp.zeros((C, 1, 1), dtype=jnp.float32)

    out = sru_forward(x, weight, bias, group_num=GROUP_NUM,
                      gate_threshold=GATE_T, eps=EPS)
    jax.block_until_ready(out)

    # Pure-JAX reference of the full SRU forward (two-pass stats, unfused math).
    xg = x.reshape(N, GROUP_NUM, -1)
    mean = xg.mean(axis=2, keepdims=True)
    std = jnp.sqrt(jnp.sum((xg - mean) ** 2, axis=2, keepdims=True) / (xg.shape[2] - 1))
    gn = ((xg - mean) / (std + EPS)).reshape(N, C, H, W) * weight + bias
    w_gamma = (weight / jnp.sum(weight)).reshape(1, C, 1, 1)
    r = 1.0 / (1.0 + jnp.exp(-(gn * w_gamma)))
    info = r >= GATE_T
    x1 = jnp.where(info, gn, 0.0)
    x2 = jnp.where(info, 0.0, gn)
    half = C // 2
    ref = jnp.concatenate([x1[:, :half] + x2[:, half:],
                           x1[:, half:] + x2[:, :half]], axis=1)

    assert jnp.allclose(out, ref, atol=2e-4, rtol=2e-4), \
        float(jnp.max(jnp.abs(out - ref)))
    print("KERNEL_OK")
</pallas_src>

<mosaic_0001>
module attributes {stable_mosaic.version = 11 : i64} {
  func.func @_sru_kernel(%arg0: i32, %arg1: i32, %arg2: memref<1x2x1x8x256xf32, #tpu.memory_space<vmem>>, %arg3: memref<2x1x8x1xf32, #tpu.memory_space<vmem>>, %arg4: memref<2x1x8x1xf32, #tpu.memory_space<vmem>>, %arg5: memref<2x1x8x1xf32, #tpu.memory_space<vmem>>, %arg6: memref<1x2x1x8x256xf32, #tpu.memory_space<vmem>>) attributes {dimension_semantics = [#tpu.dimension_semantics<parallel>, #tpu.dimension_semantics<parallel>], iteration_bounds = array<i64: 2, 4>, scalar_prefetch = 0 : i64, scratch_operands = 0 : i64, tpu.core_type = #tpu.core_type<tc>, window_params = [{transform_indices = @transform_0, window_bounds = array<i64: 1, 2, 1, 8, 256>}, {transform_indices = @transform_1, window_bounds = array<i64: 2, 1, 8, 1>}, {transform_indices = @transform_2, window_bounds = array<i64: 2, 1, 8, 1>}, {transform_indices = @transform_3, window_bounds = array<i64: 2, 1, 8, 1>}, {transform_indices = @transform_4, window_bounds = array<i64: 1, 2, 1, 8, 256>}]} {
    %c0 = arith.constant 0 : index
    %c0_0 = arith.constant 0 : index
    %c0_1 = arith.constant 0 : index
    %c0_2 = arith.constant 0 : index
    %c0_3 = arith.constant 0 : index
    %0 = vector.load %arg2[%c0, %c0_0, %c0_1, %c0_2, %c0_3] : memref<1x2x1x8x256xf32, #tpu.memory_space<vmem>>, vector<1x2x1x8x256xf32>
    %cst = arith.constant dense<0.000000e+00> : vector<1x2x1x8xf32>
    %1 = vector.multi_reduction <add>, %0, %cst [4] : vector<1x2x1x8x256xf32> to vector<1x2x1x8xf32>
    %2 = vector.shape_cast %1 : vector<1x2x1x8xf32> to vector<1x2x1x8x1xf32>
    %cst_4 = arith.constant dense<0.000000e+00> : vector<1x2x1x1xf32>
    %3 = vector.multi_reduction <add>, %2, %cst_4 [3] : vector<1x2x1x8x1xf32> to vector<1x2x1x1xf32>
    %4 = vector.shape_cast %3 : vector<1x2x1x1xf32> to vector<1x2x1x1x1xf32>
    %5 = arith.mulf %0, %0 : vector<1x2x1x8x256xf32>
    %cst_5 = arith.constant dense<0.000000e+00> : vector<1x2x1x8xf32>
    %6 = vector.multi_reduction <add>, %5, %cst_5 [4] : vector<1x2x1x8x256xf32> to vector<1x2x1x8xf32>
    %7 = vector.shape_cast %6 : vector<1x2x1x8xf32> to vector<1x2x1x8x1xf32>
    %cst_6 = arith.constant dense<0.000000e+00> : vector<1x2x1x1xf32>
    %8 = vector.multi_reduction <add>, %7, %cst_6 [3] : vector<1x2x1x8x1xf32> to vector<1x2x1x1xf32>
    %9 = vector.shape_cast %8 : vector<1x2x1x1xf32> to vector<1x2x1x1x1xf32>
    %cst_7 = arith.constant 4.8828125E-4 : f32
    %10 = vector.broadcast %cst_7 : f32 to vector<1x2x1x1x1xf32>
    %11 = arith.mulf %4, %10 : vector<1x2x1x1x1xf32>
    %12 = arith.mulf %4, %11 : vector<1x2x1x1x1xf32>
    %13 = arith.subf %9, %12 : vector<1x2x1x1x1xf32>
    %cst_8 = arith.constant 2.047000e+03 : f32
    %14 = vector.broadcast %cst_8 : f32 to vector<1x2x1x1x1xf32>
    %15 = arith.divf %13, %14 : vector<1x2x1x1x1xf32>
    %cst_9 = arith.constant 0.000000e+00 : f32
    %16 = vector.broadcast %cst_9 : f32 to vector<1x2x1x1x1xf32>
    %17 = arith.maximumf %15, %16 : vector<1x2x1x1x1xf32>
    %18 = math.sqrt %17 : vector<1x2x1x1x1xf32>
    %cst_10 = arith.constant 1.000000e-10 : f32
    %19 = vector.broadcast %cst_10 : f32 to vector<1x2x1x1x1xf32>
    %20 = arith.addf %18, %19 : vector<1x2x1x1x1xf32>
    %cst_11 = arith.constant 1.000000e+00 : f32
    %21 = vector.broadcast %cst_11 : f32 to vector<1x2x1x1x1xf32>
    %22 = arith.divf %21, %20 : vector<1x2x1x1x1xf32>
    %c0_12 = arith.constant 0 : index
    %c0_13 = arith.constant 0 : index
    %c0_14 = arith.constant 0 : index
    %c0_15 = arith.constant 0 : index
    %23 = vector.load %arg3[%c0_12, %c0_13, %c0_14, %c0_15] : memref<2x1x8x1xf32, #tpu.memory_space<vmem>>, vector<2x1x8x1xf32>
    %24 = vector.shape_cast %23 : vector<2x1x8x1xf32> to vector<1x2x1x8x1xf32>
    %c0_16 = arith.constant 0 : index
    %c0_17 = arith.constant 0 : index
    %c0_18 = arith.constant 0 : index
    %c0_19 = arith.constant 0 : index
    %25 = vector.load %arg4[%c0_16, %c0_17, %c0_18, %c0_19] : memref<2x1x8x1xf32, #tpu.memory_space<vmem>>, vector<2x1x8x1xf32>
    %26 = vector.shape_cast %25 : vector<2x1x8x1xf32> to vector<1x2x1x8x1xf32>
    %c0_20 = arith.constant 0 : index
    %c0_21 = arith.constant 0 : index
    %c0_22 = arith.constant 0 : index
    %c0_23 = arith.constant 0 : index
    %27 = vector.load %arg5[%c0_20, %c0_21, %c0_22, %c0_23] : memref<2x1x8x1xf32, #tpu.memory_space<vmem>>, vector<2x1x8x1xf32>
    %28 = vector.shape_cast %27 : vector<2x1x8x1xf32> to vector<1x2x1x8x1xf32>
    %29 = vector.broadcast %22 : vector<1x2x1x1x1xf32> to vector<1x2x1x8x1xf32>
    %30 = arith.mulf %24, %29 : vector<1x2x1x8x1xf32>
    %31 = vector.broadcast %11 : vector<1x2x1x1x1xf32> to vector<1x2x1x8x1xf32>
    %32 = arith.mulf %31, %30 : vector<1x2x1x8x1xf32>
    %33 = arith.subf %26, %32 : vector<1x2x1x8x1xf32>
    %34 = vector.broadcast %30 : vector<1x2x1x8x1xf32> to vector<1x2x1x8x256xf32>
    %35 = arith.mulf %0, %34 : vector<1x2x1x8x256xf32>
    %36 = vector.broadcast %33 : vector<1x2x1x8x1xf32> to vector<1x2x1x8x256xf32>
    %37 = arith.addf %35, %36 : vector<1x2x1x8x256xf32>
    %38 = vector.broadcast %28 : vector<1x2x1x8x1xf32> to vector<1x2x1x8x256xf32>
    %39 = arith.mulf %37, %38 : vector<1x2x1x8x256xf32>
    %cst_24 = arith.constant 0.000000e+00 : f32
    %40 = vector.broadcast %cst_24 : f32 to vector<1x2x1x8x256xf32>
    %41 = arith.subf %40, %39 : vector<1x2x1x8x256xf32>
    %42 = math.exp %41 : vector<1x2x1x8x256xf32>
    %cst_25 = arith.constant 1.000000e+00 : f32
    %43 = vector.broadcast %cst_25 : f32 to vector<1x2x1x8x256xf32>
    %44 = arith.addf %43, %42 : vector<1x2x1x8x256xf32>
    %cst_26 = arith.constant 1.000000e+00 : f32
    %45 = vector.broadcast %cst_26 : f32 to vector<1x2x1x8x256xf32>
    %46 = arith.divf %45, %44 : vector<1x2x1x8x256xf32>
    %cst_27 = arith.constant 5.000000e-01 : f32
    %47 = vector.broadcast %cst_27 : f32 to vector<1x2x1x8x256xf32>
    %48 = arith.cmpf oge, %46, %47 : vector<1x2x1x8x256xf32>
    %49 = vector.extract_strided_slice %37 {offsets = [0, 0, 0, 0, 0], sizes = [1, 1, 1, 8, 256], strides = [1, 1, 1, 1, 1]} : vector<1x2x1x8x256xf32> to vector<1x1x1x8x256xf32>
    %50 = vector.extract_strided_slice %37 {offsets = [0, 1, 0, 0, 0], sizes = [1, 1, 1, 8, 256], strides = [1, 1, 1, 1, 1]} : vector<1x2x1x8x256xf32> to vector<1x1x1x8x256xf32>
    %51 = vector.extract_strided_slice %48 {offsets = [0, 0, 0, 0, 0], sizes = [1, 1, 1, 8, 256], strides = [1, 1, 1, 1, 1]} : vector<1x2x1x8x256xi1> to vector<1x1x1x8x256xi1>
    %52 = vector.extract_strided_slice %48 {offsets = [0, 1, 0, 0, 0], sizes = [1, 1, 1, 8, 256], strides = [1, 1, 1, 1, 1]} : vector<1x2x1x8x256xi1> to vector<1x1x1x8x256xi1>
    %cst_28 = arith.constant 0.000000e+00 : f32
    %53 = vector.broadcast %cst_28 : f32 to vector<1x1x1x8x256xf32>
    %54 = arith.select %51, %49, %53 : vector<1x1x1x8x256xi1>, vector<1x1x1x8x256xf32>
    %cst_29 = arith.constant 0.000000e+00 : f32
    %55 = vector.broadcast %cst_29 : f32 to vector<1x1x1x8x256xf32>
    %56 = arith.select %52, %50, %55 : vector<1x1x1x8x256xi1>, vector<1x1x1x8x256xf32>
    %57 = arith.subf %49, %54 : vector<1x1x1x8x256xf32>
    %58 = arith.subf %50, %56 : vector<1x1x1x8x256xf32>
    %59 = arith.addf %54, %58 : vector<1x1x1x8x256xf32>
    %60 = arith.addf %56, %57 : vector<1x1x1x8x256xf32>
    %61 = tpu.concatenate %59, %60 in 1 : vector<1x1x1x8x256xf32>, vector<1x1x1x8x256xf32> -> vector<1x2x1x8x256xf32>
    %c0_30 = arith.constant 0 : index
    %c0_31 = arith.constant 0 : index
    %c0_32 = arith.constant 0 : index
    %c0_33 = arith.constant 0 : index
    %c0_34 = arith.constant 0 : index
    %62 = vector.load %arg6[%c0_30, %c0_31, %c0_32, %c0_33, %c0_34] : memref<1x2x1x8x256xf32, #tpu.memory_space<vmem>>, vector<1x2x1x8x256xf32>
    tpu.vector_store %arg6[%c0_30, %c0_31, %c0_32, %c0_33, %c0_34], %61 {strides = array<i32>} : memref<1x2x1x8x256xf32, #tpu.memory_space<vmem>>, vector<1x2x1x8x256xf32>,
    return
  }
  func.func @transform_0(%arg0: i32, %arg1: i32) -> (i32, i32, i32, i32, i32) {
    %c0_i32 = arith.constant 0 : i32
    %c0_i32_0 = arith.constant 0 : i32
    %c0_i32_1 = arith.constant 0 : i32
    %c0_i32_2 = arith.constant 0 : i32
    return %arg0, %c0_i32, %arg1, %c0_i32_0, %c0_i32_1 : i32, i32, i32, i32, i32
  }
  func.func @transform_1(%arg0: i32, %arg1: i32) -> (i32, i32, i32, i32) {
    %c0_i32 = arith.constant 0 : i32
    %c0_i32_0 = arith.constant 0 : i32
    %c0_i32_1 = arith.constant 0 : i32
    %c0_i32_2 = arith.constant 0 : i32
    return %c0_i32, %arg1, %c0_i32_0, %c0_i32_1 : i32, i32, i32, i32
  }
  func.func @transform_2(%arg0: i32, %arg1: i32) -> (i32, i32, i32, i32) {
    %c0_i32 = arith.constant 0 : i32
    %c0_i32_0 = arith.constant 0 : i32
    %c0_i32_1 = arith.constant 0 : i32
    %c0_i32_2 = arith.constant 0 : i32
    return %c0_i32, %arg1, %c0_i32_0, %c0_i32_1 : i32, i32, i32, i32
  }
  func.func @transform_3(%arg0: i32, %arg1: i32) -> (i32, i32, i32, i32) {
    %c0_i32 = arith.constant 0 : i32
    %c0_i32_0 = arith.constant 0 : i32
    %c0_i32_1 = arith.constant 0 : i32
    %c0_i32_2 = arith.constant 0 : i32
    return %c0_i32, %arg1, %c0_i32_0, %c0_i32_1 : i32, i32, i32, i32
  }
  func.func @transform_4(%arg0: i32, %arg1: i32) -> (i32, i32, i32, i32, i32) {
    %c0_i32 = arith.constant 0 : i32
    %c0_i32_0 = arith.constant 0 : i32
    %c0_i32_1 = arith.constant 0 : i32
    %c0_i32_2 = arith.constant 0 : i32
    return %arg0, %c0_i32, %arg1, %c0_i32_0, %c0_i32_1 : i32, i32, i32, i32, i32
  }
}

</mosaic_0001>

<llo_original>
// kernel: tpu_custom_call.1
$region0: #{tpu_custom_call.1}
  #allocation0 [shape = 'u32[]', space=smem, size = 0x4, offset = 0x4, fixed_abs, tag = 'smem constant byte address 0x4 - core index']
  #allocation1 [shape = 'u32[72,128]{1,0:T(1,128)}', space=vmem, size = 0x9000, scoped, tag = 'internal scratch']
  %s0 = inlined_call_operand.hbm [shape: f32[2,2,4,8,256], index: 0, kind: input, shape index: {}]
  %s1 = inlined_call_operand.vmem [shape: f32[2,4,8,1], index: 1, kind: input, shape index: {}]
  %s2 = inlined_call_operand.vmem [shape: f32[2,4,8,1], index: 2, kind: input, shape index: {}]
  %s3 = inlined_call_operand.vmem [shape: f32[2,4,8,1], index: 3, kind: input, shape index: {}]
  %s4 = inlined_call_operand.hbm [shape: f32[2,2,4,8,256], index: 4, kind: output, shape index: {}]
  %s5 = sld [smem:[#allocation0]]
  $region167: #{tpu_custom_call.1} parent=0
    _
  %s7 = ssub.s32 1, %s5
  %s8 = scalar_select 0, %s7, %s5
  $region1: #{tpu_custom_call.1} parent=0
    #allocation2 [shape = 'u8[32768]{0}', space=vmem, size = 0x8000, scoped, tag = 'input window, operand 0']
    #allocation3 [shape = 's32[2]{0}', space=sflag, size = 0x8, scoped, tag = 'scoped memory for tpu_custom_call.1']
    #allocation4 [shape = 's32[2]{0}', space=sflag, size = 0x8, scoped, tag = 'scoped memory for tpu_custom_call.1']
    #allocation5 [shape = 'u8[16384]{0}', space=vmem, size = 0x4000, scoped, tag = 'input window, operand 1']
    #allocation6 [shape = 'u8[16384]{0}', space=vmem, size = 0x4000, scoped, tag = 'input window, operand 2']
    #allocation7 [shape = 'u8[16384]{0}', space=vmem, size = 0x4000, scoped, tag = 'input window, operand 3']
    #allocation8 [shape = 'u8[32768]{0}', space=vmem, size = 0x8000, scoped, tag = 'output window, operand 0']
    %9 = vsyncpa [#allocation3], 0
    %s10 = scalar_lea.sflag [#allocation3], 1
    %11 = vsyncpa %s10, 0
    %12 = vsyncpa [#allocation4], 0
    %s13 = scalar_lea.sflag [#allocation4], 1
    %14 = vsyncpa %s13, 0
    loop: start=0, step=1, limit=10
    $region2: #{tpu_custom_call.1} parent=1 // loop_pre_header
      _
    $region3: #{tpu_custom_call.1} parent=1 // loop_header
      %s16 = sphi 0, %s20
      %p17 = scmp.ge.s32.totalorder %s16, 10
      %s23 = sphi 0, %s35
      %s24 = sphi 0, %s31
      %s25 = sphi 0, %s23
      %s26 = sphi 0, %s24
      %s27 = sphi 0, %s25
      %s28 = sphi 0, %s26
      %s40 = sphi 0, %s42
      %s43 = sphi 0, %s40
      %s44 = sphi 0, %s43
      %s60 = sphi 0, %s44
      %s66 = sphi 0, %s68
      %s69 = sphi 0, %s66
      %s70 = sphi 0, %s69
      %s86 = sphi 0, %s70
      %s92 = sphi 0, %s94
      %s95 = sphi 0, %s92
      %s96 = sphi 0, %s95
      %s112 = sphi 0, %s96
      %s118 = sphi 0, %s120
      %s121 = sphi 0, %s118
      %s122 = sphi 0, %s121
      %s138 = sphi 0, %s122
      %s146 = sphi 0, %s148
      %s149 = sphi 0, %s146
      %s150 = sphi 0, %s149
      %s166 = sphi 0, %s150
    $region4: #{tpu_custom_call.1} parent=1 // loop_header_branch
      %19 = sbr.rel (%p17) target = $region8
    $region5: #{tpu_custom_call.1} parent=1 // loop_body
      %s21 = ssub.s32 %s16, 1
      %s22 = ssub.s32 %s16, 2
      %s29 = sadd.s32 1, %s24
      %p30 = scmp.ge.s32.totalorder %s29, 4
      %s31 = scalar_select %p30, 0, %s29
      %s32 = sadd.s32 1, %s23
      %s33 = scalar_select %p30, %s32, %s23
      %p34 = scmp.ge.s32.totalorder %s33, 2
      %s35 = scalar_select %p34, 0, %s33
      %s36 = ssub.s32 %s23, %s35
      %s37 = ssub.s32 %s24, %s31
      %s38 = sor.u32 %s36, %s37
      %p39 = scmp.eq.s32.totalorder %s38, 0
      %s41 = sadd.s32 %s40, 1
      %s42 = scalar_select %p39, %s40, %s41
      %p45 = pneg %p39
      %p46 = scmp.eq.s32.totalorder %s16, 7
      %p47 = por %p45, %p46
      %p48 = scmp.ne.s32.totalorder %s40, %s43
      %p49 = scmp.eq.s32.totalorder %s16, 0
      %p50 = por %p48, %p49
      %p51 = scmp.ne.s32.totalorder %s40, %s43
      %p52 = scmp.eq.s32.totalorder %s21, 7
      %p53 = por %p51, %p52
      %p54 = scmp.ne.s32.totalorder %s43, %s44
      %p55 = scmp.eq.s32.totalorder %s21, 0
      %p56 = por %p54, %p55
      %p57 = scmp.ne.s32.totalorder %s43, %s44
      %p58 = scmp.eq.s32.totalorder %s22, 7
      %p59 = por %p57, %p58
      %p61 = scmp.ne.s32.totalorder %s44, %s60
      %p62 = scmp.eq.s32.totalorder %s22, 0
      %p63 = por %p61, %p62
      %s64 = ssub.s32 %s24, %s31
      %p65 = scmp.eq.s32.totalorder %s64, 0
      %s67 = sadd.s32 %s66, 1
      %s68 = scalar_select %p65, %s66, %s67
      %p71 = pneg %p65
      %p72 = scmp.eq.s32.totalorder %s16, 7
      %p73 = por %p71, %p72
      %p74 = scmp.ne.s32.totalorder %s66, %s69
      %p75 = scmp.eq.s32.totalorder %s16, 0
      %p76 = por %p74, %p75
      %p77 = scmp.ne.s32.totalorder %s66, %s69
      %p78 = scmp.eq.s32.totalorder %s21, 7
      %p79 = por %p77, %p78
      %p80 = scmp.ne.s32.totalorder %s69, %s70
      %p81 = scmp.eq.s32.totalorder %s21, 0
      %p82 = por %p80, %p81
      %p83 = scmp.ne.s32.totalorder %s69, %s70
      %p84 = scmp.eq.s32.totalorder %s22, 7
      %p85 = por %p83, %p84
      %p87 = scmp.ne.s32.totalorder %s70, %s86
      %p88 = scmp.eq.s32.totalorder %s22, 0
      %p89 = por %p87, %p88
      %s90 = ssub.s32 %s24, %s31
      %p91 = scmp.eq.s32.totalorder %s90, 0
      %s93 = sadd.s32 %s92, 1
      %s94 = scalar_select %p91, %s92, %s93
      %p97 = pneg %p91
      %p98 = scmp.eq.s32.totalorder %s16, 7
      %p99 = por %p97, %p98
      %p100 = scmp.ne.s32.totalorder %s92, %s95
      %p101 = scmp.eq.s32.totalorder %s16, 0
      %p102 = por %p100, %p101
      %p103 = scmp.ne.s32.totalorder %s92, %s95
      %p104 = scmp.eq.s32.totalorder %s21, 7
      %p105 = por %p103, %p104
      %p106 = scmp.ne.s32.totalorder %s95, %s96
      %p107 = scmp.eq.s32.totalorder %s21, 0
      %p108 = por %p106, %p107
      %p109 = scmp.ne.s32.totalorder %s95, %s96
      %p110 = scmp.eq.s32.totalorder %s22, 7
      %p111 = por %p109, %p110
      %p113 = scmp.ne.s32.totalorder %s96, %s112
      %p114 = scmp.eq.s32.totalorder %s22, 0
      %p115 = por %p113, %p114
      %s116 = ssub.s32 %s24, %s31
      %p117 = scmp.eq.s32.totalorder %s116, 0
      %s119 = sadd.s32 %s118, 1
      %s120 = scalar_select %p117, %s118, %s119
      %p123 = pneg %p117
      %p124 = scmp.eq.s32.totalorder %s16, 7
      %p125 = por %p123, %p124
      %p126 = scmp.ne.s32.totalorder %s118, %s121
      %p127 = scmp.eq.s32.totalorder %s16, 0
      %p128 = por %p126, %p127
      %p129 = scmp.ne.s32.totalorder %s118, %s121
      %p130 = scmp.eq.s32.totalorder %s21, 7
      %p131 = por %p129, %p130
      %p132 = scmp.ne.s32.totalorder %s121, %s122
      %p133 = scmp.eq.s32.totalorder %s21, 0
      %p134 = por %p132, %p133
      %p135 = scmp.ne.s32.totalorder %s121, %s122
      %p136 = scmp.eq.s32.totalorder %s22, 7
      %p137 = por %p135, %p136
      %p139 = scmp.ne.s32.totalorder %s122, %s138
      %p140 = scmp.eq.s32.totalorder %s22, 0
      %p141 = por %p139, %p140
      %s142 = ssub.s32 %s23, %s35
      %s143 = ssub.s32 %s24, %s31
      %s144 = sor.u32 %s142, %s143
      %p145 = scmp.eq.s32.totalorder %s144, 0
      %s147 = sadd.s32 %s146, 1
      %s148 = scalar_select %p145, %s146, %s147
      %p151 = pneg %p145
      %p152 = scmp.eq.s32.totalorder %s16, 7
      %p153 = por %p151, %p152
      %p154 = scmp.ne.s32.totalorder %s146, %s149
      %p155 = scmp.eq.s32.totalorder %s16, 0
      %p156 = por %p154, %p155
      %p157 = scmp.ne.s32.totalorder %s146, %s149
      %p158 = scmp.eq.s32.totalorder %s21, 7
      %p159 = por %p157, %p158
      %p160 = scmp.ne.s32.totalorder %s149, %s150
      %p161 = scmp.eq.s32.totalorder %s21, 0
      %p162 = por %p160, %p161
      %p163 = scmp.ne.s32.totalorder %s149, %s150
      %p164 = scmp.eq.s32.totalorder %s22, 7
      %p165 = por %p163, %p164
      %p167 = scmp.ne.s32.totalorder %s150, %s166
      %p168 = scmp.eq.s32.totalorder %s22, 0
      %p169 = por %p167, %p168
      %p170 = scmp.le.s32.totalorder 1, %s16
      %p171 = scmp.lt.s32.totalorder %s16, 9
      %p172 = pnand %p170, %p171
      %p173 = pneg %p172
      // Predicated region
      $region9: #{tpu_custom_call.1} parent=5 // pred_check
        _
      $region10: #{tpu_custom_call.1} parent=5 // pred_check_branch
        %175 = sbr.rel (%p172) target = $region12
      $region11: #{tpu_custom_call.1} parent=5 // pred_region
        %s176 = ssub.s32 %s16, 1
      $region12: #{tpu_custom_call.1} parent=5 // pred_fallthru
        _
      %p177 = scmp.lt.s32.totalorder %s16, 8
      // Predicated region
      $region13: #{tpu_custom_call.1} parent=5 // pred_check
        %p178 = pneg %p177
      $region14: #{tpu_custom_call.1} parent=5 // pred_check_branch
        %180 = sbr.rel (%p178) target = $region16
      $region15: #{tpu_custom_call.1} parent=5 // pred_region
        // Predicated region
        $region17: #{tpu_custom_call.1} parent=15 // pred_check
          %p181 = pneg %p50
        $region18: #{tpu_custom_call.1} parent=15 // pred_check_branch
          %183 = sbr.rel (%p181) target = $region20
        $region19: #{tpu_custom_call.1} parent=15 // pred_region
          %s184 = sand.u32 %s40, 1
          %s185 = scalar_lea.sflag [#allocation3], %s184
          %s186 = sand.u32 %s40, 1
          %s187 = smul.addr %s186, 32
          %s188 = scalar_lea.vmem [#allocation2], %s187
          %190 = vsyncadd %s185, 0
          %s191 = smul.addr %s24, 2
          %s192 = smul.addr %s23, 16
          %s193 = sadd.s32 %s191, %s192
          %s194 = smul.addr %s193, 8
          %s195 = scalar_lea.hbm %s0, %s194
          %s196 = sshll.u32 %s195, 4
          %s197 = int_to_ptr.hbm [resolvable:$true] %s196
          %s198 = sshll.u32 %s188, 4
          %s199 = int_to_ptr.vmem [resolvable:$true] %s198
          %204 = dma.hbm_to_vmem [thread:$0]  %s197, 512, %s199, %s185, 1024, 256, 16
        $region20: #{tpu_custom_call.1} parent=15 // pred_fallthru
          _
        // Predicated region
        $region21: #{tpu_custom_call.1} parent=15 // pred_check
          %p205 = pneg %p76
        $region22: #{tpu_custom_call.1} parent=15 // pred_check_branch
          %207 = sbr.rel (%p205) target = $region24
        $region23: #{tpu_custom_call.1} parent=15 // pred_region
          %s208 = sand.u32 %s66, 1
          %s209 = sand.u32 %s66, 1
          %s210 = smul.addr %s209, 16
          %s211 = scalar_lea.vmem [#allocation5], %s210
          %s212 = smul.addr %s24, 8
          %s213 = scalar_lea.vmem %s1, %s212
          // Predicated region
          $region25: #{tpu_custom_call.1} parent=23 // pred_check
            _
          $region26: #{tpu_custom_call.1} parent=23 // pred_check_branch
            %215 = sbr.rel (0) target = $region28
          $region27: #{tpu_custom_call.1} parent=23 // pred_region
            // Predicated region
            $region29: #{tpu_custom_call.1} parent=27 // pred_check
              _
            $region30: #{tpu_custom_call.1} parent=27 // pred_check_branch
              %217 = sbr.rel (0) target = $region32
            $region31: #{tpu_custom_call.1} parent=27 // pred_region
              // Predicated region
              $region44: #{tpu_custom_call.1} parent=31 // pred_check
                _
              $region45: #{tpu_custom_call.1} parent=31 // pred_check_branch
                %235 = sbr.rel (0) target = $region47
              $region46: #{tpu_custom_call.1} parent=31 // pred_region
                loop: start=0, step=1, limit=1
                $region48: #{tpu_custom_call.1} parent=46 // loop_pre_header
                  _
                $region49: #{tpu_custom_call.1} parent=46 // loop_header
                  %s237 = sphi 0, %s241
                  %p238 = scmp.ge.s32.totalorder %s237, 1
                  %s242 = sphi %s213, %s213
                  %s243 = sphi %s211, %s211
                $region50: #{tpu_custom_call.1} parent=46 // loop_header_branch
                  %240 = sbr.rel (%p238) target = $region54
                $region51: #{tpu_custom_call.1} parent=46 // loop_body
                  %v244 = vld [vmem:[%s242] sm:$0xff]
                  %245 = vst [vmem:[%s243] sm:$0xff] %v244
                  %v246 = vld [vmem:[%s242 + $0x20] sm:$0xff]
                  %247 = vst [vmem:[%s243 + $0x8] sm:$0xff] %v246
                $region52: #{tpu_custom_call.1} parent=46 // loop_footer
                  %s241 = sadd.s32 1, %s237
                $region53: #{tpu_custom_call.1} parent=46 // loop_footer_branch
                  %236 = sbr.rel target = $region49
                $region54: #{tpu_custom_call.1} parent=46 // loop_exit
                  _
              $region47: #{tpu_custom_call.1} parent=31 // pred_fallthru
                _
              // Predicated region
              $region55: #{tpu_custom_call.1} parent=31 // pred_check
                _
              $region56: #{tpu_custom_call.1} parent=31 // pred_check_branch
                %249 = sbr.rel target = $region58
              $region57: #{tpu_custom_call.1} parent=31 // pred_region
                _
              $region58: #{tpu_custom_call.1} parent=31 // pred_fallthru
                _
            $region32: #{tpu_custom_call.1} parent=27 // pred_fallthru
              _
            // Predicated region
            $region33: #{tpu_custom_call.1} parent=27 // pred_check
              _
            $region34: #{tpu_custom_call.1} parent=27 // pred_check_branch
              %219 = sbr.rel target = $region36
            $region35: #{tpu_custom_call.1} parent=27 // pred_region
              %s221 = ssub.s32 256, 1
              loop: start=0, step=1, limit=1
              $region37: #{tpu_custom_call.1} parent=35 // loop_pre_header
                _
              $region38: #{tpu_custom_call.1} parent=35 // loop_header
                %s223 = sphi 0, %s227
                %p224 = scmp.ge.s32.totalorder %s223, 1
                %s228 = sphi %s213, %s213
                %s229 = sphi %s211, %s211
              $region39: #{tpu_custom_call.1} parent=35 // loop_header_branch
                %226 = sbr.rel (%p224) target = $region43
              $region40: #{tpu_custom_call.1} parent=35 // loop_body
                %v230 = vld [vmem:[%s228] sm:%s221]
                %231 = vst [vmem:[%s229] sm:%s221] %v230
                %v232 = vld [vmem:[%s228 + $0x20] sm:%s221]
                %233 = vst [vmem:[%s229 + $0x8] sm:%s221] %v232
              $region41: #{tpu_custom_call.1} parent=35 // loop_footer
                %s227 = sadd.s32 1, %s223
              $region42: #{tpu_custom_call.1} parent=35 // loop_footer_branch
                %222 = sbr.rel target = $region38
              $region43: #{tpu_custom_call.1} parent=35 // loop_exit
                _
            $region36: #{tpu_custom_call.1} parent=27 // pred_fallthru
              _
          $region28: #{tpu_custom_call.1} parent=23 // pred_fallthru
            _
          %250 = vnop
        $region24: #{tpu_custom_call.1} parent=15 // pred_fallthru
          _
        // Predicated region
        $region59: #{tpu_custom_call.1} parent=15 // pred_check
          %p251 = pneg %p102
        $region60: #{tpu_custom_call.1} parent=15 // pred_check_branch
          %253 = sbr.rel (%p251) target = $region62
        $region61: #{tpu_custom_call.1} parent=15 // pred_region
          %s254 = sand.u32 %s92, 1
          %s255 = sand.u32 %s92, 1
          %s256 = smul.addr %s255, 16
          %s257 = scalar_lea.vmem [#allocation6], %s256
          %s258 = smul.addr %s24, 8
          %s259 = scalar_lea.vmem %s2, %s258
          // Predicated region
          $region63: #{tpu_custom_call.1} parent=61 // pred_check
            _
          $region64: #{tpu_custom_call.1} parent=61 // pred_check_branch
            %261 = sbr.rel (0) target = $region66
          $region65: #{tpu_custom_call.1} parent=61 // pred_region
            // Predicated region
            $region67: #{tpu_custom_call.1} parent=65 // pred_check
              _
            $region68: #{tpu_custom_call.1} parent=65 // pred_check_branch
              %263 = sbr.rel (0) target = $region70
            $region69: #{tpu_custom_call.1} parent=65 // pred_region
              // Predicated region
              $region82: #{tpu_custom_call.1} parent=69 // pred_check
                _
              $region83: #{tpu_custom_call.1} parent=69 // pred_check_branch
                %281 = sbr.rel (0) target = $region85
              $region84: #{tpu_custom_call.1} parent=69 // pred_region
                loop: start=0, step=1, limit=1
                $region86: #{tpu_custom_call.1} parent=84 // loop_pre_header
                  _
                $region87: #{tpu_custom_call.1} parent=84 // loop_header
                  %s283 = sphi 0, %s287
                  %p284 = scmp.ge.s32.totalorder %s283, 1
                  %s288 = sphi %s259, %s259
                  %s289 = sphi %s257, %s257
                $region88: #{tpu_custom_call.1} parent=84 // loop_header_branch
                  %286 = sbr.rel (%p284) target = $region92
                $region89: #{tpu_custom_call.1} parent=84 // loop_body
                  %v290 = vld [vmem:[%s288] sm:$0xff]
                  %291 = vst [vmem:[%s289] sm:$0xff] %v290
                  %v292 = vld [vmem:[%s288 + $0x20] sm:$0xff]
                  %293 = vst [vmem:[%s289 + $0x8] sm:$0xff] %v292
                $region90: #{tpu_custom_call.1} parent=84 // loop_footer
                  %s287 = sadd.s32 1, %s283
                $region91: #{tpu_custom_call.1} parent=84 // loop_footer_branch
                  %282 = sbr.rel target = $region87
                $region92: #{tpu_custom_call.1} parent=84 // loop_exit
                  _
              $region85: #{tpu_custom_call.1} parent=69 // pred_fallthru
                _
              // Predicated region
              $region93: #{tpu_custom_call.1} parent=69 // pred_check
                _
              $region94: #{tpu_custom_call.1} parent=69 // pred_check_branch
                %295 = sbr.rel target = $region96
              $region95: #{tpu_custom_call.1} parent=69 // pred_region
                _
              $region96: #{tpu_custom_call.1} parent=69 // pred_fallthru
                _
            $region70: #{tpu_custom_call.1} parent=65 // pred_fallthru
              _
            // Predicated region
            $region71: #{tpu_custom_call.1} parent=65 // pred_check
              _
            $region72: #{tpu_custom_call.1} parent=65 // pred_check_branch
              %265 = sbr.rel target = $region74
            $region73: #{tpu_custom_call.1} parent=65 // pred_region
              %s267 = ssub.s32 256, 1
              loop: start=0, step=1, limit=1
              $region75: #{tpu_custom_call.1} parent=73 // loop_pre_header
                _
              $region76: #{tpu_custom_call.1} parent=73 // loop_header
                %s269 = sphi 0, %s273
                %p270 = scmp.ge.s32.totalorder %s269, 1
                %s274 = sphi %s259, %s259
                %s275 = sphi %s257, %s257
              $region77: #{tpu_custom_call.1} parent=73 // loop_header_branch
                %272 = sbr.rel (%p270) target = $region81
              $region78: #{tpu_custom_call.1} parent=73 // loop_body
                %v276 = vld [vmem:[%s274] sm:%s267]
                %277 = vst [vmem:[%s275] sm:%s267] %v276
                %v278 = vld [vmem:[%s274 + $0x20] sm:%s267]
                %279 = vst [vmem:[%s275 + $0x8] sm:%s267] %v278
              $region79: #{tpu_custom_call.1} parent=73 // loop_footer
                %s273 = sadd.s32 1, %s269
              $region80: #{tpu_custom_call.1} parent=73 // loop_footer_branch
                %268 = sbr.rel target = $region76
              $region81: #{tpu_custom_call.1} parent=73 // loop_exit
                _
            $region74: #{tpu_custom_call.1} parent=65 // pred_fallthru
              _
          $region66: #{tpu_custom_call.1} parent=61 // pred_fallthru
            _
          %296 = vnop
        $region62: #{tpu_custom_call.1} parent=15 // pred_fallthru
          _
        // Predicated region
        $region97: #{tpu_custom_call.1} parent=15 // pred_check
          %p297 = pneg %p128
        $region98: #{tpu_custom_call.1} parent=15 // pred_check_branch
          %299 = sbr.rel (%p297) target = $region100
        $region99: #{tpu_custom_call.1} parent=15 // pred_region
          %s300 = sand.u32 %s118, 1
          %s301 = sand.u32 %s118, 1
          %s302 = smul.addr %s301, 16
          %s303 = scalar_lea.vmem [#allocation7], %s302
          %s304 = smul.addr %s24, 8
          %s305 = scalar_lea.vmem %s3, %s304
          // Predicated region
          $region101: #{tpu_custom_call.1} parent=99 // pred_check
            _
          $region102: #{tpu_custom_call.1} parent=99 // pred_check_branch
            %307 = sbr.rel (0) target = $region104
          $region103: #{tpu_custom_call.1} parent=99 // pred_region
            // Predicated region
            $region105: #{tpu_custom_call.1} parent=103 // pred_check
              _
            $region106: #{tpu_custom_call.1} parent=103 // pred_check_branch
              %309 = sbr.rel (0) target = $region108
            $region107: #{tpu_custom_call.1} parent=103 // pred_region
              // Predicated region
              $region120: #{tpu_custom_call.1} parent=107 // pred_check
                _
              $region121: #{tpu_custom_call.1} parent=107 // pred_check_branch
                %327 = sbr.rel (0) target = $region123
              $region122: #{tpu_custom_call.1} parent=107 // pred_region
                loop: start=0, step=1, limit=1
                $region124: #{tpu_custom_call.1} parent=122 // loop_pre_header
                  _
                $region125: #{tpu_custom_call.1} parent=122 // loop_header
                  %s329 = sphi 0, %s333
                  %p330 = scmp.ge.s32.totalorder %s329, 1
                  %s334 = sphi %s305, %s305
                  %s335 = sphi %s303, %s303
                $region126: #{tpu_custom_call.1} parent=122 // loop_header_branch
                  %332 = sbr.rel (%p330) target = $region130
                $region127: #{tpu_custom_call.1} parent=122 // loop_body
                  %v336 = vld [vmem:[%s334] sm:$0xff]
                  %337 = vst [vmem:[%s335] sm:$0xff] %v336
                  %v338 = vld [vmem:[%s334 + $0x20] sm:$0xff]
                  %339 = vst [vmem:[%s335 + $0x8] sm:$0xff] %v338
                $region128: #{tpu_custom_call.1} parent=122 // loop_footer
                  %s333 = sadd.s32 1, %s329
                $region129: #{tpu_custom_call.1} parent=122 // loop_footer_branch
                  %328 = sbr.rel target = $region125
                $region130: #{tpu_custom_call.1} parent=122 // loop_exit
                  _
              $region123: #{tpu_custom_call.1} parent=107 // pred_fallthru
                _
              // Predicated region
              $region131: #{tpu_custom_call.1} parent=107 // pred_check
                _
              $region132: #{tpu_custom_call.1} parent=107 // pred_check_branch
                %341 = sbr.rel target = $region134
              $region133: #{tpu_custom_call.1} parent=107 // pred_region
                _
              $region134: #{tpu_custom_call.1} parent=107 // pred_fallthru
                _
            $region108: #{tpu_custom_call.1} parent=103 // pred_fallthru
              _
            // Predicated region
            $region109: #{tpu_custom_call.1} parent=103 // pred_check
              _
            $region110: #{tpu_custom_call.1} parent=103 // pred_check_branch
              %311 = sbr.rel target = $region112
            $region111: #{tpu_custom_call.1} parent=103 // pred_region
              %s313 = ssub.s32 256, 1
              loop: start=0, step=1, limit=1
              $region113: #{tpu_custom_call.1} parent=111 // loop_pre_header
                _
              $region114: #{tpu_custom_call.1} parent=111 // loop_header
                %s315 = sphi 0, %s319
                %p316 = scmp.ge.s32.totalorder %s315, 1
                %s320 = sphi %s305, %s305
                %s321 = sphi %s303, %s303
              $region115: #{tpu_custom_call.1} parent=111 // loop_header_branch
                %318 = sbr.rel (%p316) target = $region119
              $region116: #{tpu_custom_call.1} parent=111 // loop_body
                %v322 = vld [vmem:[%s320] sm:%s313]
                %323 = vst [vmem:[%s321] sm:%s313] %v322
                %v324 = vld [vmem:[%s320 + $0x20] sm:%s313]
                %325 = vst [vmem:[%s321 + $0x8] sm:%s313] %v324
              $region117: #{tpu_custom_call.1} parent=111 // loop_footer
                %s319 = sadd.s32 1, %s315
              $region118: #{tpu_custom_call.1} parent=111 // loop_footer_branch
                %314 = sbr.rel target = $region114
              $region119: #{tpu_custom_call.1} parent=111 // loop_exit
                _
            $region112: #{tpu_custom_call.1} parent=103 // pred_fallthru
              _
          $region104: #{tpu_custom_call.1} parent=99 // pred_fallthru
            _
          %342 = vnop
        $region100: #{tpu_custom_call.1} parent=15 // pred_fallthru
          _
      $region16: #{tpu_custom_call.1} parent=5 // pred_fallthru
        _
      %p343 = scmp.le.s32.totalorder 1, %s16
      %p344 = scmp.lt.s32.totalorder %s16, 9
      %p345 = pnand %p343, %p344
      %p346 = pneg %p345
      // Predicated region
      $region135: #{tpu_custom_call.1} parent=5 // pred_check
        _
      $region136: #{tpu_custom_call.1} parent=5 // pred_check_branch
        %348 = sbr.rel (%p345) target = $region138
      $region137: #{tpu_custom_call.1} parent=5 // pred_region
        %s349 = ssub.s32 %s16, 1
        %s350 = sand.u32 %s43, 1
        %s351 = scalar_lea.sflag [#allocation3], %s350
        %s352 = sand.u32 %s43, 1
        %s353 = smul.addr %s352, 32
        %s354 = scalar_lea.vmem [#allocation2], %s353
        // Predicated region
        $region139: #{tpu_custom_call.1} parent=137 // pred_check
          %p355 = pneg %p56
        $region140: #{tpu_custom_call.1} parent=137 // pred_check_branch
          %357 = sbr.rel (%p355) target = $region142
        $region141: #{tpu_custom_call.1} parent=137 // pred_region
          %359 = dma.done %s351, 512
        $region142: #{tpu_custom_call.1} parent=137 // pred_fallthru
          _
        %s360 = sand.u32 %s69, 1
        %s361 = sand.u32 %s69, 1
        %s362 = smul.addr %s361, 16
        %s363 = scalar_lea.vmem [#allocation5], %s362
        // Predicated region
        $region143: #{tpu_custom_call.1} parent=137 // pred_check
          %p364 = pneg %p82
        $region144: #{tpu_custom_call.1} parent=137 // pred_check_branch
          %366 = sbr.rel (%p364) target = $region146
        $region145: #{tpu_custom_call.1} parent=137 // pred_region
          _
        $region146: #{tpu_custom_call.1} parent=137 // pred_fallthru
          _
        %s367 = sand.u32 %s95, 1
        %s368 = sand.u32 %s95, 1
        %s369 = smul.addr %s368, 16
        %s370 = scalar_lea.vmem [#allocation6], %s369
        // Predicated region
        $region147: #{tpu_custom_call.1} parent=137 // pred_check
          %p371 = pneg %p108
        $region148: #{tpu_custom_call.1} parent=137 // pred_check_branch
          %373 = sbr.rel (%p371) target = $region150
        $region149: #{tpu_custom_call.1} parent=137 // pred_region
          _
        $region150: #{tpu_custom_call.1} parent=137 // pred_fallthru
          _
        %s374 = sand.u32 %s121, 1
        %s375 = sand.u32 %s121, 1
        %s376 = smul.addr %s375, 16
        %s377 = scalar_lea.vmem [#allocation7], %s376
        // Predicated region
        $region151: #{tpu_custom_call.1} parent=137 // pred_check
          %p378 = pneg %p134
        $region152: #{tpu_custom_call.1} parent=137 // pred_check_branch
          %380 = sbr.rel (%p378) target = $region154
        $region153: #{tpu_custom_call.1} parent=137 // pred_region
          _
        $region154: #{tpu_custom_call.1} parent=137 // pred_fallthru
          _
        %s381 = sand.u32 %s43, 1
        %s382 = scalar_lea.sflag [#allocation3], %s381
        %s383 = sand.u32 %s43, 1
        %s384 = smul.addr %s383, 32
        %s385 = scalar_lea.vmem [#allocation2], %s384
        %p386 = pneg %p56
        %p387 = pneg %p53
        %s388 = sand.u32 %s69, 1
        %s389 = sand.u32 %s69, 1
        %s390 = smul.addr %s389, 16
        %s391 = scalar_lea.vmem [#allocation5], %s390
        %p392 = pneg %p82
        %p393 = pneg %p79
        %s394 = sand.u32 %s95, 1
        %s395 = sand.u32 %s95, 1
        %s396 = smul.addr %s395, 16
        %s397 = scalar_lea.vmem [#allocation6], %s396
        %p398 = pneg %p108
        %p399 = pneg %p105
        %s400 = sand.u32 %s121, 1
        %s401 = sand.u32 %s121, 1
        %s402 = smul.addr %s401, 16
        %s403 = scalar_lea.vmem [#allocation7], %s402
        %p404 = pneg %p134
        %p405 = pneg %p131
        %p406 = pneg %p162
        %p407 = pneg %p159
        %s408 = sand.u32 %s149, 1
        %s409 = scalar_lea.sflag [#allocation4], %s408
        %s410 = sand.u32 %s149, 1
        %s411 = smul.addr %s410, 32
        %s412 = scalar_lea.vmem [#allocation8], %s411
        %v413 = vld [vmem:[%s354] sm:$0xff]
        %v414 = vld [vmem:[%s354 + $0x8] sm:$0xff]
        %v415 = vld [vmem:[%s354 + $0x10] sm:$0xff]
        %v416 = vld [vmem:[%s354 + $0x18] sm:$0xff]
        %v417 = vadd.f32 %v413, %v414
        %418 = vadd.xlane.f32.xlu0 %v417
        %v419 = vpop.xlane.xlu0 %418
        %v420 = vadd.f32 %v415, %v416
        %421 = vadd.xlane.f32.xlu0 %v420
        %v422 = vpop.xlane.xlu0 %421
        %v423 = vrot.slane %v419, 4
        %v424 = vadd.f32 %v419, %v423
        %v425 = vrot.slane %v424, 2
        %v426 = vadd.f32 %v424, %v425
        %v427 = vrot.slane %v426, 1
        %v428 = vadd.f32 %v426, %v427
        %v429 = vrot.slane %v422, 4
        %v430 = vadd.f32 %v422, %v429
        %v431 = vrot.slane %v430, 2
        %v432 = vadd.f32 %v430, %v431
        %v433 = vrot.slane %v432, 1
        %v434 = vadd.f32 %v432, %v433
        %v435 = vmul.f32 %v413, %v413
        %v436 = vmul.f32 %v414, %v414
        %v437 = vmul.f32 %v415, %v415
        %v438 = vmul.f32 %v416, %v416
        %v439 = vadd.f32 %v435, %v436
        %440 = vadd.xlane.f32.xlu0 %v439
        %v441 = vpop.xlane.xlu0 %440
        %v442 = vadd.f32 %v437, %v438
        %443 = vadd.xlane.f32.xlu0 %v442
        %v444 = vpop.xlane.xlu0 %443
        %v445 = vrot.slane %v441, 4
        %v446 = vadd.f32 %v441, %v445
        %v447 = vrot.slane %v446, 2
        %v448 = vadd.f32 %v446, %v447
        %v449 = vrot.slane %v448, 1
        %v450 = vadd.f32 %v448, %v449
        %v451 = vrot.slane %v444, 4
        %v452 = vadd.f32 %v444, %v451
        %v453 = vrot.slane %v452, 2
        %v454 = vadd.f32 %v452, %v453
        %v455 = vrot.slane %v454, 1
        %v456 = vadd.f32 %v454, %v455
        %v457 = vmul.f32 %v428, 0.00048828125
        %v458 = vmul.f32 %v434, 0.00048828125
        %v459 = vmul.f32 %v428, %v457
        %v460 = vmul.f32 %v434, %v458
        %v461 = vsub.f32 %v450, %v459
        %v462 = vsub.f32 %v456, %v460
        %v463 = vrcp.pop 2047.0
        %v464 = vmul.f32 2047.0, %v463
        %v465 = vsub.f32 1.0, %v464
        %v466 = vmul.f32 %v463, %v465
        %v467 = vadd.f32 %v463, %v466
        %vm468 = vweird.f32 %v463
        %v469 = vsel %vm468, %v463, %v467
        %v470 = vmul.f32 %v461, %v469
        %v471 = vmul.f32 %v462, %v469
        %v472 = vmax.f32 %v470, 0.0
        %v473 = vmax.f32 %v471, 0.0
        %v474 = vrsqrt.pop %v472
        %v475 = vmul.f32 %v474, %v472
        %v476 = vmul.f32 %v475, %v474
        %v477 = vmul.f32 0.5, %v476
        %v478 = vsub.f32 1.5, %v477
        %v479 = vmul.f32 %v474, %v478
        %v480 = vmul.f32 %v472, %v479
        %vm481 = vcmp.eq.f32.partialorder %v472, inf
        %v482 = vsel %vm481, %v472, %v480
        %vm483 = vcmp.eq.f32.partialorder %v472, 0.0
        %v484 = vand.u32 %v472, 2147483648
        %v485 = vsel %vm483, %v484, %v482
        %v486 = vrsqrt.pop %v473
        %v487 = vmul.f32 %v486, %v473
        %v488 = vmul.f32 %v487, %v486
        %v489 = vmul.f32 0.5, %v488
        %v490 = vsub.f32 1.5, %v489
        %v491 = vmul.f32 %v486, %v490
        %v492 = vmul.f32 %v473, %v491
        %vm493 = vcmp.eq.f32.partialorder %v473, inf
        %v494 = vsel %vm493, %v473, %v492
        %vm495 = vcmp.eq.f32.partialorder %v473, 0.0
        %v496 = vand.u32 %v473, 2147483648
        %v497 = vsel %vm495, %v496, %v494
        %v498 = vadd.f32 %v485, 1e-10
        %v499 = vadd.f32 %v497, 1e-10
        %v500 = vrcp.pop %v498
        %v501 = vmul.f32 %v498, %v500
        %v502 = vsub.f32 1.0, %v501
        %v503 = vmul.f32 %v500, %v502
        %v504 = vadd.f32 %v500, %v503
        %vm505 = vweird.f32 %v498
        %vm506 = vweird.f32 %v500
        %vm507 = vmor %vm505, %vm506
        %v508 = vsel %vm507, %v500, %v504
        %v509 = vand.u32 2147483647, %v498
        %vm510 = vcmp.eq.f32.partialorder %v509, 8.507059e+37
        %v511 = vand.u32 %v498, 2147483648
        %v512 = vor.u32 1.1754944e-38, %v511
        %v513 = vsel %vm510, %v512, %v508
        %v514 = vmul.f32 1.0, %v513
        %v515 = vrcp.pop %v499
        %v516 = vmul.f32 %v499, %v515
        %v517 = vsub.f32 1.0, %v516
        %v518 = vmul.f32 %v515, %v517
        %v519 = vadd.f32 %v515, %v518
        %vm520 = vweird.f32 %v499
        %vm521 = vweird.f32 %v515
        %vm522 = vmor %vm520, %vm521
        %v523 = vsel %vm522, %v515, %v519
        %v524 = vand.u32 2147483647, %v499
        %vm525 = vcmp.eq.f32.partialorder %v524, 8.507059e+37
        %v526 = vand.u32 %v499, 2147483648
        %v527 = vor.u32 1.1754944e-38, %v526
        %v528 = vsel %vm525, %v527, %v523
        %v529 = vmul.f32 1.0, %v528
        %v530 = vld [vmem:[%s363] sm:$0xff]
        %v531 = vld [vmem:[%s363 + $0x8] sm:$0xff]
        %v532 = vld [vmem:[%s370] sm:$0xff]
        %v533 = vld [vmem:[%s370 + $0x8] sm:$0xff]
        %v534 = vld [vmem:[%s377] sm:$0xff]
        %v535 = vld [vmem:[%s377 + $0x8] sm:$0xff]
        %v536 = vmul.f32 %v530, %v514
        %v537 = vmul.f32 %v531, %v529
        %v538 = vmul.f32 %v457, %v536
        %v539 = vmul.f32 %v458, %v537
        %v540 = vsub.f32 %v532, %v538
        %v541 = vsub.f32 %v533, %v539
        %543 = vset.pattern.permute.xlu0 0
        %544 = vperm.xlu0 %543, %v536
        %v545 = vpop.permute.xlu0 %544
        %548 = vset.pattern.permute.xlu0 0
        %549 = vperm.xlu0 %548, %v537
        %v550 = vpop.permute.xlu0 %549
        %v552 = vmul.f32 %v413, %v545
        %v553 = vmul.f32 %v414, %v545
        %v554 = vmul.f32 %v415, %v550
        %v555 = vmul.f32 %v416, %v550
        %557 = vset.pattern.permute.xlu0 0
        %558 = vperm.xlu0 %557, %v540
        %v559 = vpop.permute.xlu0 %558
        %562 = vset.pattern.permute.xlu0 0
        %563 = vperm.xlu0 %562, %v541
        %v564 = vpop.permute.xlu0 %563
        %v566 = vadd.f32 %v552, %v559
        %v567 = vadd.f32 %v553, %v559
        %v568 = vadd.f32 %v554, %v564
        %v569 = vadd.f32 %v555, %v564
        %571 = vset.pattern.permute.xlu0 0
        %572 = vperm.xlu0 %571, %v534
        %v573 = vpop.permute.xlu0 %572
        %576 = vset.pattern.permute.xlu0 0
        %577 = vperm.xlu0 %576, %v535
        %v578 = vpop.permute.xlu0 %577
        %v580 = vmul.f32 %v566, %v573
        %v581 = vmul.f32 %v567, %v573
        %v582 = vmul.f32 %v568, %v578
        %v583 = vmul.f32 %v569, %v578
        %v584 = vsub.f32 0.0, %v580
        %v585 = vsub.f32 0.0, %v581
        %v586 = vsub.f32 0.0, %v582
        %v587 = vsub.f32 0.0, %v583
        %v588 = vmul.f32 %v584, 1.442695
        %v589 = vpow.pop %v588
        %v590 = vmul.f32 %v585, 1.442695
        %v591 = vpow.pop %v590
        %v592 = vmul.f32 %v586, 1.442695
        %v593 = vpow.pop %v592
        %v594 = vmul.f32 %v587, 1.442695
        %v595 = vpow.pop %v594
        %v596 = vadd.f32 %v589, 1.0
        %v597 = vadd.f32 %v591, 1.0
        %v598 = vadd.f32 %v593, 1.0
        %v599 = vadd.f32 %v595, 1.0
        %v600 = vrcp.pop %v596
        %v601 = vmul.f32 %v596, %v600
        %v602 = vsub.f32 1.0, %v601
        %v603 = vmul.f32 %v600, %v602
        %v604 = vadd.f32 %v600, %v603
        %vm605 = vweird.f32 %v596
        %vm606 = vweird.f32 %v600
        %vm607 = vmor %vm605, %vm606
        %v608 = vsel %vm607, %v600, %v604
        %v609 = vand.u32 2147483647, %v596
        %vm610 = vcmp.eq.f32.partialorder %v609, 8.507059e+37
        %v611 = vand.u32 %v596, 2147483648
        %v612 = vor.u32 1.1754944e-38, %v611
        %v613 = vsel %vm610, %v612, %v608
        %v614 = vmul.f32 1.0, %v613
        %v615 = vrcp.pop %v597
        %v616 = vmul.f32 %v597, %v615
        %v617 = vsub.f32 1.0, %v616
        %v618 = vmul.f32 %v615, %v617
        %v619 = vadd.f32 %v615, %v618
        %vm620 = vweird.f32 %v597
        %vm621 = vweird.f32 %v615
        %vm622 = vmor %vm620, %vm621
        %v623 = vsel %vm622, %v615, %v619
        %v624 = vand.u32 2147483647, %v597
        %vm625 = vcmp.eq.f32.partialorder %v624, 8.507059e+37
        %v626 = vand.u32 %v597, 2147483648
        %v627 = vor.u32 1.1754944e-38, %v626
        %v628 = vsel %vm625, %v627, %v623
        %v629 = vmul.f32 1.0, %v628
        %v630 = vrcp.pop %v598
        %v631 = vmul.f32 %v598, %v630
        %v632 = vsub.f32 1.0, %v631
        %v633 = vmul.f32 %v630, %v632
        %v634 = vadd.f32 %v630, %v633
        %vm635 = vweird.f32 %v598
        %vm636 = vweird.f32 %v630
        %vm637 = vmor %vm635, %vm636
        %v638 = vsel %vm637, %v630, %v634
        %v639 = vand.u32 2147483647, %v598
        %vm640 = vcmp.eq.f32.partialorder %v639, 8.507059e+37
        %v641 = vand.u32 %v598, 2147483648
        %v642 = vor.u32 1.1754944e-38, %v641
        %v643 = vsel %vm640, %v642, %v638
        %v644 = vmul.f32 1.0, %v643
        %v645 = vrcp.pop %v599
        %v646 = vmul.f32 %v599, %v645
        %v647 = vsub.f32 1.0, %v646
        %v648 = vmul.f32 %v645, %v647
        %v649 = vadd.f32 %v645, %v648
        %vm650 = vweird.f32 %v599
        %vm651 = vweird.f32 %v645
        %vm652 = vmor %vm650, %vm651
        %v653 = vsel %vm652, %v645, %v649
        %v654 = vand.u32 2147483647, %v599
        %vm655 = vcmp.eq.f32.partialorder %v654, 8.507059e+37
        %v656 = vand.u32 %v599, 2147483648
        %v657 = vor.u32 1.1754944e-38, %v656
        %v658 = vsel %vm655, %v657, %v653
        %v659 = vmul.f32 1.0, %v658
        %vm660 = vcmp.ge.f32.partialorder %v614, 0.5
        %vm661 = vcmp.ge.f32.partialorder %v629, 0.5
        %vm662 = vcmp.ge.f32.partialorder %v644, 0.5
        %vm663 = vcmp.ge.f32.partialorder %v659, 0.5
        %v664 = vsel %vm660, %v566, 0.0
        %v665 = vsel %vm661, %v567, 0.0
        %v666 = vsel %vm662, %v568, 0.0
        %v667 = vsel %vm663, %v569, 0.0
        %v668 = vsub.f32 %v566, %v664
        %v669 = vsub.f32 %v567, %v665
        %v670 = vsub.f32 %v568, %v666
        %v671 = vsub.f32 %v569, %v667
        %v672 = vadd.f32 %v664, %v670
        %v673 = vadd.f32 %v665, %v671
        %v674 = vadd.f32 %v666, %v668
        %v675 = vadd.f32 %v667, %v669
        %676 = vst [vmem:[%s412] sm:$0xff] %v672
        %677 = vst [vmem:[%s412 + $0x8] sm:$0xff] %v673
        %678 = vst [vmem:[%s412 + $0x10] sm:$0xff] %v674
        %679 = vst [vmem:[%s412 + $0x18] sm:$0xff] %v675
        %s680 = sand.u32 %s149, 1
        %s681 = scalar_lea.sflag [#allocation4], %s680
        %s682 = sand.u32 %s149, 1
        %s683 = smul.addr %s682, 32
        %s684 = scalar_lea.vmem [#allocation8], %s683
        // Predicated region
        $region155: #{tpu_custom_call.1} parent=137 // pred_check
          %p685 = pneg %p159
        $region156: #{tpu_custom_call.1} parent=137 // pred_check_branch
          %687 = sbr.rel (%p685) target = $region158
        $region157: #{tpu_custom_call.1} parent=137 // pred_region
          %689 = vsyncadd %s681, 0
          %s690 = smul.addr %s26, 2
          %s691 = smul.addr %s25, 16
          %s692 = sadd.s32 %s690, %s691
          %s693 = smul.addr %s692, 8
          %s694 = scalar_lea.hbm %s4, %s693
          %s695 = sshll.u32 %s684, 4
          %s696 = int_to_ptr.vmem [resolvable:$true] %s695
          %s697 = sshll.u32 %s694, 4
          %s698 = int_to_ptr.hbm [resolvable:$true] %s697
          %703 = dma.vmem_to_hbm [thread:$0]  %s696, 512, %s698, %s681, 256, 1024, 16
        $region158: #{tpu_custom_call.1} parent=137 // pred_fallthru
          _
      $region138: #{tpu_custom_call.1} parent=5 // pred_fallthru
        _
      %p704 = scmp.le.s32.totalorder 2, %s16
      // Predicated region
      $region159: #{tpu_custom_call.1} parent=5 // pred_check
        %p705 = pneg %p704
      $region160: #{tpu_custom_call.1} parent=5 // pred_check_branch
        %707 = sbr.rel (%p705) target = $region162
      $region161: #{tpu_custom_call.1} parent=5 // pred_region
        %s708 = ssub.s32 %s16, 2
        // Predicated region
        $region163: #{tpu_custom_call.1} parent=161 // pred_check
          %p709 = pneg %p165
        $region164: #{tpu_custom_call.1} parent=161 // pred_check_branch
          %711 = sbr.rel (%p709) target = $region166
        $region165: #{tpu_custom_call.1} parent=161 // pred_region
          %s712 = sand.u32 %s150, 1
          %s713 = scalar_lea.sflag [#allocation4], %s712
          %s714 = sand.u32 %s150, 1
          %s715 = smul.addr %s714, 32
          %s716 = scalar_lea.vmem [#allocation8], %s715
          %718 = dma.done %s713, 512
        $region166: #{tpu_custom_call.1} parent=161 // pred_fallthru
          _
      $region162: #{tpu_custom_call.1} parent=5 // pred_fallthru
        _
    $region6: #{tpu_custom_call.1} parent=1 // loop_footer
      %s20 = sadd.s32 1, %s16
    $region7: #{tpu_custom_call.1} parent=1 // loop_footer_branch
      %15 = sbr.rel target = $region3
    $region8: #{tpu_custom_call.1} parent=1 // loop_exit
      _
    %719 = vsyncpa [#allocation3], 1
    %s720 = scalar_lea.sflag [#allocation3], 1
    %721 = vsyncpa %s720, 1
    %722 = vsyncpa [#allocation4], 1
    %s723 = scalar_lea.sflag [#allocation4], 1
    %724 = vsyncpa %s723, 1

</llo_original>
